<compile_context>
chip_gen: v5e
topology: v5e:2x2
jax: 0.10.0
libtpu: 0.0.40
codegen_flags: <defaults>
</compile_context>

<pallas_src>
import jax
import jax.numpy as jnp
from jax.experimental import pallas as pl
from jax.experimental.pallas import tpu as pltpu


def _round_up(a, b):
    return ((a + b - 1) // b) * b


def _patch_merge_kernel(x_ref, w_ref, b_ref, o_ref):
    # x_ref: (TM, K)    bf16 merged-patch tokens (BN affine folded into w/b)
    # w_ref: (K,  Cout) bf16 folded weight  W' = diag(scale) @ W
    # b_ref: (1,  Cout) f32  folded bias    b  = shift @ W
    # o_ref: (TM, Cout) out_dtype (f32 MXU accumulate, cast on store)
    acc = jnp.dot(x_ref[...], w_ref[...], preferred_element_type=jnp.float32)
    o_ref[...] = (acc + b_ref[...]).astype(o_ref.dtype)


def _pick_tile(M, K, Cout, tm_req):
    """Token-tile rows: MXU-aligned, VMEM-capped, >=2 grid steps when it pays."""
    tm = min(tm_req, _round_up(M, 8))
    # v7x has 2 TensorCores: keep at least 2 grid steps on the "parallel" axis
    # whenever there is enough work to split (single-TC v5e/v6e are unaffected).
    if M > 512:
        tm = min(tm, _round_up(-(-M // 2), 256))
    if tm >= 256:
        tm = (tm // 256) * 256            # MXU M alignment (also mult of 128)
    else:
        tm = _round_up(max(tm, 8), 8)

    # VMEM cap: double-buffered bf16 input/output tiles + resident bf16 weight
    # and f32 bias (conservatively counted double-buffered).  Stays well under
    # the 32 MiB scoped limit set below.
    def vmem_bytes(t):
        return (2 * t * K * 2) + (2 * t * Cout * 2) + (2 * K * Cout * 2) + (2 * Cout * 4)

    budget = 20 * 1024 * 1024
    while tm > 256 and vmem_bytes(tm) > budget:
        tm = max(256, ((tm // 2) // 256) * 256)
    return tm


def patch_merging_forward(x, conv_w, gamma, beta, eps=1e-5, tm=2048,
                          out_dtype=jnp.bfloat16):
    """Forward pass of PatchMerging.

    x:      (N, C, H, W) float32, NCHW
    conv_w: (2C, 4C, 1, 1) 1x1 conv weight (bias=False)
    gamma, beta: (4C,) BatchNorm2d affine params (training-mode batch stats)
    """
    N, C, H, W = x.shape
    # PyTorch module intends even-truncation of odd spatial dims (its odd
    # branch uses buggy 5-D indexing); we apply the intended semantics.
    H2, W2 = (H // 2) * 2, (W // 2) * 2
    x = x[:, :, :H2, :W2]
    Ho, Wo = H2 // 2, W2 // 2

    K = 4 * C
    Cout = 2 * C
    M = N * Ho * Wo

    # Free reshape of the (contiguous) NCHW f32 input.
    xr = x.astype(jnp.float32).reshape(N, C, Ho, 2, Wo, 2)   # (n,c,ho,dh,wo,dw)

    # ----- BatchNorm2d (training mode) batch statistics in f32 from the
    # pre-rearranged tensor, as ONE fused E[x] / E[x^2] pass (XLA fuses both
    # reductions over the same producer; no bf16 quantization in the stats).
    mean_cdw = jnp.mean(xr, axis=(0, 2, 4))                  # (C, 2, 2)
    msq_cdw = jnp.mean(jnp.square(xr), axis=(0, 2, 4))       # (C, 2, 2)
    var_cdw = jnp.maximum(msq_cdw - jnp.square(mean_cdw), 0.0)
    # Token feature order is (dw, dh, c) == concat([x0,x1,x2,x3]); stats above
    # come out as (c, dh, dw) -> permute + flatten to (K,).
    mean = jnp.transpose(mean_cdw, (2, 1, 0)).reshape(K)
    var = jnp.transpose(var_cdw, (2, 1, 0)).reshape(K)

    scale = gamma.astype(jnp.float32) * jax.lax.rsqrt(var + eps)     # (K,)
    shift = beta.astype(jnp.float32) - mean * scale                  # (K,)

    # Fold BN affine into the 1x1 conv: y = (x*scale + shift) @ W
    #                                     =  x @ (scale[:,None]*W) + shift@W
    w_mat = conv_w.reshape(Cout, K).T.astype(jnp.float32)            # (K, Cout)
    w_fold = (scale[:, None] * w_mat).astype(jnp.bfloat16)           # (K, Cout)
    b_fold = (shift[None, :] @ w_mat).astype(jnp.float32)            # (1, Cout)

    # ----- 2x2 patch-merging rearrangement: one reshape + one transpose,
    # materialized once as bf16 (half the HBM traffic of f32).
    # token[(n,ho,wo), dw*2C + dh*C + c] = x[n, c, 2ho+dh, 2wo+dw]
    # TODO(synk): fusing this strided gather (and the final NCHW transpose)
    # into the kernel / accepting NHWC would remove the remaining token
    # materialization; kept in XLA glue for robustness.
    tokens = jnp.transpose(xr, (0, 2, 4, 5, 3, 1)).reshape(M, K).astype(jnp.bfloat16)

    tile = _pick_tile(M, K, Cout, tm)
    grid = (pl.cdiv(M, tile),)   # ragged tail block -> masked loads/stores

    out = pl.pallas_call(
        _patch_merge_kernel,
        out_shape=jax.ShapeDtypeStruct((M, Cout), out_dtype),
        grid=grid,
        in_specs=[
            pl.BlockSpec((tile, K), lambda i: (i, 0)),
            pl.BlockSpec((K, Cout), lambda i: (0, 0)),     # resident weight
            pl.BlockSpec((1, Cout), lambda i: (0, 0)),     # resident bias
        ],
        out_specs=pl.BlockSpec((tile, Cout), lambda i: (i, 0)),
        compiler_params=pltpu.CompilerParams(
            dimension_semantics=("parallel",),
            vmem_limit_bytes=32 * 1024 * 1024,
        ),
    )(tokens, w_fold, b_fold)

    out = out.reshape(N, Ho, Wo, Cout)
    # Final reshape in the PyTorch module is an identity on the conv output
    # layout; return NCHW to match the module's output.
    return jnp.transpose(out, (0, 3, 1, 2))


def patch_merging_ref(x, conv_w, gamma, beta, eps=1e-5):
    """Pure-JAX f32 reference mirroring the PyTorch forward (training-mode BN)."""
    N, C, H, W = x.shape
    H2, W2 = (H // 2) * 2, (W // 2) * 2
    x = x[:, :, :H2, :W2]
    xh = jnp.transpose(x, (0, 2, 3, 1))
    x0 = xh[:, 0::2, 0::2, :]
    x1 = xh[:, 1::2, 0::2, :]
    x2 = xh[:, 0::2, 1::2, :]
    x3 = xh[:, 1::2, 1::2, :]
    xm = jnp.concatenate([x0, x1, x2, x3], axis=-1)       # (N, Ho, Wo, 4C)
    xm = jnp.transpose(xm, (0, 3, 1, 2))                  # (N, 4C, Ho, Wo)
    mean = jnp.mean(xm, axis=(0, 2, 3), keepdims=True)
    var = jnp.mean((xm - mean) ** 2, axis=(0, 2, 3), keepdims=True)
    xn = gamma.reshape(1, -1, 1, 1) * (xm - mean) / jnp.sqrt(var + eps) \
        + beta.reshape(1, -1, 1, 1)
    w = conv_w.reshape(2 * C, 4 * C)
    return jnp.einsum("nkhw,ok->nohw", xn, w)


if __name__ == "__main__":
    key = jax.random.PRNGKey(0)
    k1, k2, k3, k4 = jax.random.split(key, 4)

    N, C, H, W = 2, 4, 16, 16          # dim = 4
    x = jax.random.normal(k1, (N, C, H, W), dtype=jnp.float32)
    # nn.Conv2d(4*dim, 2*dim, kernel_size=1, bias=False) weight:
    conv_w = 0.1 * jax.random.normal(k2, (2 * C, 4 * C, 1, 1), dtype=jnp.float32)
    # nn.BatchNorm2d(4*dim) affine params (deterministic, non-trivial):
    gamma = 1.0 + 0.1 * jax.random.normal(k3, (4 * C,), dtype=jnp.float32)
    beta = 0.1 * jax.random.normal(k4, (4 * C,), dtype=jnp.float32)

    out = jax.jit(patch_merging_forward)(x, conv_w, gamma, beta)
    out = jax.block_until_ready(out)

    ref = patch_merging_ref(x, conv_w, gamma, beta)
    assert out.shape == (N, 2 * C, H // 2, W // 2), out.shape
    out_f32 = out.astype(jnp.float32)
    # bf16 token/weight streaming + bf16 output (f32 MXU accumulate) ->
    # bf16-level tolerance.
    max_err = float(jnp.max(jnp.abs(out_f32 - ref)))
    assert jnp.allclose(out_f32, ref, atol=3e-2, rtol=3e-2), max_err
    print("KERNEL_OK")
</pallas_src>

<mosaic_0001>
module attributes {stable_mosaic.version = 11 : i64} {
  func.func @_patch_merge_kernel(%arg0: i32, %arg1: memref<128x16xbf16, #tpu.memory_space<vmem>>, %arg2: memref<16x8xbf16, #tpu.memory_space<vmem>>, %arg3: memref<1x8xf32, #tpu.memory_space<vmem>>, %arg4: memref<128x8xbf16, #tpu.memory_space<vmem>>) attributes {dimension_semantics = [#tpu.dimension_semantics<parallel>], iteration_bounds = array<i64: 1>, scalar_prefetch = 0 : i64, scratch_operands = 0 : i64, tpu.core_type = #tpu.core_type<tc>, window_params = [{transform_indices = @transform_0, window_bounds = array<i64: 128, 16>}, {pipeline_mode = #tpu.pipeline_mode<synchronous>, transform_indices = @transform_1, window_bounds = array<i64: 16, 8>}, {pipeline_mode = #tpu.pipeline_mode<synchronous>, transform_indices = @transform_2, window_bounds = array<i64: 1, 8>}, {transform_indices = @transform_3, window_bounds = array<i64: 128, 8>}]} {
    %c0 = arith.constant 0 : index
    %c0_0 = arith.constant 0 : index
    %0 = vector.load %arg1[%c0, %c0_0] : memref<128x16xbf16, #tpu.memory_space<vmem>>, vector<128x16xbf16>
    %c0_1 = arith.constant 0 : index
    %c0_2 = arith.constant 0 : index
    %1 = vector.load %arg2[%c0_1, %c0_2] : memref<16x8xbf16, #tpu.memory_space<vmem>>, vector<16x8xbf16>
    %cst = arith.constant dense<0.000000e+00> : vector<128x8xf32>
    %2 = tpu.matmul %0, %1, %cst {dimension_numbers = #tpu.dot_dimension_numbers<[1], [0], [0], [1], [0, 0, 1, 1], [], []>} : vector<128x16xbf16>, vector<16x8xbf16>, vector<128x8xf32> -> vector<128x8xf32>
    %c0_3 = arith.constant 0 : index
    %c0_4 = arith.constant 0 : index
    %3 = vector.load %arg3[%c0_3, %c0_4] : memref<1x8xf32, #tpu.memory_space<vmem>>, vector<1x8xf32>
    %4 = vector.broadcast %3 : vector<1x8xf32> to vector<128x8xf32>
    %5 = arith.addf %2, %4 : vector<128x8xf32>
    %6 = arith.truncf %5 : vector<128x8xf32> to vector<128x8xbf16>
    %c0_5 = arith.constant 0 : index
    %c0_6 = arith.constant 0 : index
    %7 = vector.load %arg4[%c0_5, %c0_6] : memref<128x8xbf16, #tpu.memory_space<vmem>>, vector<128x8xbf16>
    tpu.vector_store %arg4[%c0_5, %c0_6], %6 {strides = array<i32>} : memref<128x8xbf16, #tpu.memory_space<vmem>>, vector<128x8xbf16>,
    return
  }
  func.func @transform_0(%arg0: i32) -> (i32, i32) {
    %c0_i32 = arith.constant 0 : i32
    %c0_i32_0 = arith.constant 0 : i32
    return %arg0, %c0_i32 : i32, i32
  }
  func.func @transform_1(%arg0: i32) -> (i32, i32) {
    %c0_i32 = arith.constant 0 : i32
    %c0_i32_0 = arith.constant 0 : i32
    %c0_i32_1 = arith.constant 0 : i32
    return %c0_i32, %c0_i32_0 : i32, i32
  }
  func.func @transform_2(%arg0: i32) -> (i32, i32) {
    %c0_i32 = arith.constant 0 : i32
    %c0_i32_0 = arith.constant 0 : i32
    %c0_i32_1 = arith.constant 0 : i32
    return %c0_i32, %c0_i32_0 : i32, i32
  }
  func.func @transform_3(%arg0: i32) -> (i32, i32) {
    %c0_i32 = arith.constant 0 : i32
    %c0_i32_0 = arith.constant 0 : i32
    return %arg0, %c0_i32 : i32, i32
  }
}

</mosaic_0001>

<llo_original>
// kernel: patch_merging_forward.1
$region0: #{patch_merging_forward.1}
  #allocation0 [shape = 'u32[]', space=smem, size = 0x4, offset = 0x4, fixed_abs, tag = 'smem constant byte address 0x4 - core index']
  #allocation1 [shape = 'u32[72,128]{1,0:T(1,128)}', space=vmem, size = 0x9000, scoped, tag = 'internal scratch']
  %s0 = inlined_call_operand.vmem [shape: bf16[128,16], index: 0, kind: input, shape index: {}]
  %s1 = inlined_call_operand.vmem [shape: bf16[16,8], index: 1, kind: input, shape index: {}]
  %s2 = inlined_call_operand.vmem [shape: f32[1,8], index: 2, kind: input, shape index: {}]
  %s3 = inlined_call_operand.vmem [shape: bf16[128,8], index: 3, kind: output, shape index: {}]
  %s4 = sld [smem:[#allocation0]]
  $region22: #{patch_merging_forward.1} parent=0
    _
  %s6 = ssub.s32 1, %s4
  %s7 = scalar_select 0, %s6, %s4
  // Predicated region
  $region2: #{patch_merging_forward.1} parent=0 // pred_check
    _
  $region3: #{patch_merging_forward.1} parent=0 // pred_check_branch
    %9 = sbr.rel (0) target = $region5
  $region4: #{patch_merging_forward.1} parent=0 // pred_region
    _
  $region5: #{patch_merging_forward.1} parent=0 // pred_fallthru
    _
  // Predicated region
  $region6: #{patch_merging_forward.1} parent=0 // pred_check
    _
  $region7: #{patch_merging_forward.1} parent=0 // pred_check_branch
    %11 = sbr.rel (0) target = $region9
  $region8: #{patch_merging_forward.1} parent=0 // pred_region
    _
  $region9: #{patch_merging_forward.1} parent=0 // pred_fallthru
    _
  // Predicated region
  $region10: #{patch_merging_forward.1} parent=0 // pred_check
    _
  $region11: #{patch_merging_forward.1} parent=0 // pred_check_branch
    %13 = sbr.rel (0) target = $region13
  $region12: #{patch_merging_forward.1} parent=0 // pred_region
    _
  $region13: #{patch_merging_forward.1} parent=0 // pred_fallthru
    _
  %v15 = vld [vmem:[%s0] sm:$0xf]
  %v16 = vld [vmem:[%s0 + $0x4] sm:$0xf]
  %v17 = vld [vmem:[%s0 + $0x8] sm:$0xf]
  %v18 = vld [vmem:[%s0 + $0xc] sm:$0xf]
  %v19 = vld [vmem:[%s0 + $0x10] sm:$0xf]
  %v20 = vld [vmem:[%s0 + $0x14] sm:$0xf]
  %v21 = vld [vmem:[%s0 + $0x18] sm:$0xf]
  %v22 = vld [vmem:[%s0 + $0x1c] sm:$0xf]
  %v23 = vld [vmem:[%s0 + $0x20] sm:$0xf]
  %v24 = vld [vmem:[%s0 + $0x24] sm:$0xf]
  %v25 = vld [vmem:[%s0 + $0x28] sm:$0xf]
  %v26 = vld [vmem:[%s0 + $0x2c] sm:$0xf]
  %v27 = vld [vmem:[%s0 + $0x30] sm:$0xf]
  %v28 = vld [vmem:[%s0 + $0x34] sm:$0xf]
  %v29 = vld [vmem:[%s0 + $0x38] sm:$0xf]
  %v30 = vld [vmem:[%s0 + $0x3c] sm:$0xf]
  %v31 = vld [vmem:[%s1] sm:$0xf]
  %v32 = vld [vmem:[%s1 + $0x4] sm:$0xf]
  %v33 = vld [vmem:[%s2] sm:$0x1]
  %v35 = vperm.slane %v33, 0
  %v53 = vunpack.c.l.b16 %v15
  %v54 = vunpack.c.l.b16 %v16
  %v55 = vunpack.c.l.b16 %v17
  %v56 = vunpack.c.l.b16 %v18
  %v57 = vunpack.c.l.b16 %v19
  %v58 = vunpack.c.l.b16 %v20
  %v59 = vunpack.c.l.b16 %v21
  %v60 = vunpack.c.l.b16 %v22
  %v61 = vunpack.c.l.b16 %v23
  %v62 = vunpack.c.l.b16 %v24
  %v63 = vunpack.c.l.b16 %v25
  %v64 = vunpack.c.l.b16 %v26
  %v65 = vunpack.c.l.b16 %v27
  %v66 = vunpack.c.l.b16 %v28
  %v67 = vunpack.c.l.b16 %v29
  %v68 = vunpack.c.l.b16 %v30
  %v69 = vpack.c.b16 %v54, %v53
  %v70 = vpack.c.b16 %v56, %v55
  %v71 = vpack.c.b16 %v58, %v57
  %v72 = vpack.c.b16 %v60, %v59
  %v73 = vpack.c.b16 %v62, %v61
  %v74 = vpack.c.b16 %v64, %v63
  %v75 = vpack.c.b16 %v66, %v65
  %v76 = vpack.c.b16 %v68, %v67
  %v79 = vunpack.c.l.b16 %v31
  %v80 = vunpack.c.l.b16 %v32
  %v81 = vpack.c.b16 %v80, %v79
  %vm83 = vcmask 130048
  %v85 = vsel %vm83, %v69, 0
  %v88 = vsel %vm83, %v70, 0
  %v91 = vsel %vm83, %v71, 0
  %v94 = vsel %vm83, %v72, 0
  %v97 = vsel %vm83, %v73, 0
  %v100 = vsel %vm83, %v74, 0
  %v103 = vsel %vm83, %v75, 0
  %v106 = vsel %vm83, %v76, 0
  %108 = vmatpush.bf16.msra.mxu0 0
  %109 = vmatpush.bf16.msra.mxu0 0
  %110 = vmatpush.bf16.msra.mxu0 0
  %111 = vmatpush.bf16.msra.mxu0 0
  %112 = vmatpush.bf16.msra.mxu0 0
  %113 = vmatpush.bf16.msra.mxu0 0
  %114 = vmatpush.bf16.msra.mxu0 0
  %115 = vmatpush.bf16.msra.mxu0 %v81
  %116 = vmatmul.bf16.gmra.mxu0 %v85
  %v117 = vpop.f32.mrf.mxu0
  %v118 = vadd.f32 %v35, %v117
  %v119 = vpop.f32.mrf.mxu0
  %v120 = vadd.f32 %v35, %v119
  %121 = vmatmul.bf16.gmra.mxu0 %v88
  %v122 = vpop.f32.mrf.mxu0
  %v123 = vadd.f32 %v35, %v122
  %v124 = vpop.f32.mrf.mxu0
  %v125 = vadd.f32 %v35, %v124
  %126 = vmatmul.bf16.gmra.mxu0 %v91
  %v127 = vpop.f32.mrf.mxu0
  %v128 = vadd.f32 %v35, %v127
  %v129 = vpop.f32.mrf.mxu0
  %v130 = vadd.f32 %v35, %v129
  %131 = vmatmul.bf16.gmra.mxu0 %v94
  %v132 = vpop.f32.mrf.mxu0
  %v133 = vadd.f32 %v35, %v132
  %v134 = vpop.f32.mrf.mxu0
  %v135 = vadd.f32 %v35, %v134
  %136 = vmatmul.bf16.gmra.mxu0 %v97
  %v137 = vpop.f32.mrf.mxu0
  %v138 = vadd.f32 %v35, %v137
  %v139 = vpop.f32.mrf.mxu0
  %v140 = vadd.f32 %v35, %v139
  %141 = vmatmul.bf16.gmra.mxu0 %v100
  %v142 = vpop.f32.mrf.mxu0
  %v143 = vadd.f32 %v35, %v142
  %v144 = vpop.f32.mrf.mxu0
  %v145 = vadd.f32 %v35, %v144
  %146 = vmatmul.bf16.gmra.mxu0 %v103
  %v147 = vpop.f32.mrf.mxu0
  %v148 = vadd.f32 %v35, %v147
  %v149 = vpop.f32.mrf.mxu0
  %v150 = vadd.f32 %v35, %v149
  %151 = vmatmul.bf16.gmra.mxu0 %v106
  %v152 = vpop.f32.mrf.mxu0
  %v153 = vadd.f32 %v35, %v152
  %v154 = vpop.f32.mrf.mxu0
  %v155 = vadd.f32 %v35, %v154
  %156 = vdwg.mxu0
  %v157 = vpack.c.bf16 %v118, %v118
  %v158 = vpack.c.bf16 %v120, %v120
  %v159 = vpack.c.bf16 %v123, %v123
  %v160 = vpack.c.bf16 %v125, %v125
  %v161 = vpack.c.bf16 %v128, %v128
  %v162 = vpack.c.bf16 %v130, %v130
  %v163 = vpack.c.bf16 %v133, %v133
  %v164 = vpack.c.bf16 %v135, %v135
  %v165 = vpack.c.bf16 %v138, %v138
  %v166 = vpack.c.bf16 %v140, %v140
  %v167 = vpack.c.bf16 %v143, %v143
  %v168 = vpack.c.bf16 %v145, %v145
  %v169 = vpack.c.bf16 %v148, %v148
  %v170 = vpack.c.bf16 %v150, %v150
  %v171 = vpack.c.bf16 %v153, %v153
  %v172 = vpack.c.bf16 %v155, %v155
  %vm173 = vcmask 60416
  %174 = vst.msk [vmem:[%s3] sm:$0xf] %vm173, %v157
  %175 = vst.msk [vmem:[%s3 + $0x4] sm:$0xf] %vm173, %v158
  %176 = vst.msk [vmem:[%s3 + $0x8] sm:$0xf] %vm173, %v159
  %177 = vst.msk [vmem:[%s3 + $0xc] sm:$0xf] %vm173, %v160
  %178 = vst.msk [vmem:[%s3 + $0x10] sm:$0xf] %vm173, %v161
  %179 = vst.msk [vmem:[%s3 + $0x14] sm:$0xf] %vm173, %v162
  %180 = vst.msk [vmem:[%s3 + $0x18] sm:$0xf] %vm173, %v163
  %181 = vst.msk [vmem:[%s3 + $0x1c] sm:$0xf] %vm173, %v164
  %182 = vst.msk [vmem:[%s3 + $0x20] sm:$0xf] %vm173, %v165
  %183 = vst.msk [vmem:[%s3 + $0x24] sm:$0xf] %vm173, %v166
  %184 = vst.msk [vmem:[%s3 + $0x28] sm:$0xf] %vm173, %v167
  %185 = vst.msk [vmem:[%s3 + $0x2c] sm:$0xf] %vm173, %v168
  %186 = vst.msk [vmem:[%s3 + $0x30] sm:$0xf] %vm173, %v169
  %187 = vst.msk [vmem:[%s3 + $0x34] sm:$0xf] %vm173, %v170
  %188 = vst.msk [vmem:[%s3 + $0x38] sm:$0xf] %vm173, %v171
  %189 = vst.msk [vmem:[%s3 + $0x3c] sm:$0xf] %vm173, %v172
  // Predicated region
  $region14: #{patch_merging_forward.1} parent=0 // pred_check
    _
  $region15: #{patch_merging_forward.1} parent=0 // pred_check_branch
    %191 = sbr.rel (0) target = $region17
  $region16: #{patch_merging_forward.1} parent=0 // pred_region
    _
  $region17: #{patch_merging_forward.1} parent=0 // pred_fallthru
    _
  // Predicated region
  $region18: #{patch_merging_forward.1} parent=0 // pred_check
    _
  $region19: #{patch_merging_forward.1} parent=0 // pred_check_branch
    %193 = sbr.rel (0) target = $region21
  $region20: #{patch_merging_forward.1} parent=0 // pred_region
    _
  $region21: #{patch_merging_forward.1} parent=0 // pred_fallthru
    _

</llo_original>
